<compile_context>
chip_gen: v7x
topology: tpu7x:2x2x1
jax: 0.10.0
libtpu: 0.0.40
codegen_flags: <defaults>
</compile_context>

<pallas_src>
import functools

import jax
import jax.numpy as jnp
from jax.experimental import pallas as pl
from jax.experimental.pallas import tpu as pltpu

LANES = 128
ACC_ROWS = 8              # one full f32 sublane tile per accumulator
EPS = 1e-6
DEFAULT_TILE_ROWS = 4096  # (4096, 128) f32 block = 2 MiB per input per buffer


def _bbce_sums_kernel(p_ref, t_ref, s_ref, a_ref, b_ref, *,
                      blk_rows, valid_rows, first_mask_block, needs_mask):
    """Accumulate per-(parallel chunk, sublane, lane) partial sums of
         s = t,  a = t*log(p+eps),  b = (1-t)*log(1-p+eps)
       into resident (8, 128) f32 accumulator tiles."""

    @pl.when(pl.program_id(1) == 0)
    def _():
        s_ref[...] = jnp.zeros_like(s_ref)
        a_ref[...] = jnp.zeros_like(a_ref)
        b_ref[...] = jnp.zeros_like(b_ref)

    p_raw = p_ref[...].astype(jnp.float32)
    t_raw = t_ref[...].astype(jnp.float32)

    def accumulate(p, t):
        log_p = jnp.log(p + EPS)
        log_1mp = jnp.log(1.0 - p + EPS)
        s_term = t
        a_term = t * log_p
        b_term = (1.0 - t) * log_1mp
        # Per-vreg partial sums: add whole (8, 128) vregs (VPU only); no
        # cross-sublane XLU reduction, no sub-8-row masked accumulator stores.
        grp = blk_rows // ACC_ROWS
        s_ref[...] += s_term.reshape(grp, ACC_ROWS, LANES).sum(axis=0)
        a_ref[...] += a_term.reshape(grp, ACC_ROWS, LANES).sum(axis=0)
        b_ref[...] += b_term.reshape(grp, ACC_ROWS, LANES).sum(axis=0)

    if not needs_mask:
        accumulate(p_raw, t_raw)
    else:
        # Global block index along the flattened row axis.
        g = pl.program_id(0) * pl.num_programs(1) + pl.program_id(1)

        @pl.when(g < first_mask_block)
        def _():
            # Fast path: block is fully in bounds — no mask math.
            accumulate(p_raw, t_raw)

        @pl.when(g >= first_mask_block)
        def _():
            # Possibly partial / fully out-of-range block: neutralize OOB rows.
            #   p := EPS -> log(p+eps) finite and (1-t)*log(1-p+eps) = log(1) = 0
            #   t := 0   -> t and t*log(p+eps) vanish.
            row0 = g * blk_rows
            ridx = row0 + jax.lax.broadcasted_iota(
                jnp.int32, (blk_rows, LANES), 0)
            valid = ridx < valid_rows
            p = jnp.where(valid, p_raw, EPS)
            t = jnp.where(valid, t_raw, 0.0)
            accumulate(p, t)


def balanced_bce_loss(preds, targets, tile_rows=DEFAULT_TILE_ROWS,
                      num_parallel_chunks=2):
    """Pallas implementation of BalancedBinaryCrossEntropyLoss.forward."""
    assert preds.shape == targets.shape
    n = preds.size
    n_f = jnp.float32(n)

    preds_flat = preds.reshape(-1)
    targets_flat = targets.reshape(-1)

    rows_full = n // LANES

    # Native sublane multiple for the input dtype (f32: 8, bf16: 16, int8: 32).
    itemsize = jnp.dtype(preds.dtype).itemsize
    sub_mult = max(ACC_ROWS, 32 // max(itemsize, 1))

    S = jnp.float32(0.0)  # sum(t)
    A = jnp.float32(0.0)  # sum(t * log(p + eps))
    B = jnp.float32(0.0)  # sum((1 - t) * log(1 - p + eps))

    bulk_elems = 0
    if rows_full >= sub_mult:
        bulk_elems = rows_full * LANES
        p2 = preds_flat[:bulk_elems].reshape(rows_full, LANES)
        t2 = targets_flat[:bulk_elems].reshape(rows_full, LANES)

        # Block row count: big when possible, multiple of the dtype's sublane
        # packing when tiling, or the full (small) extent.
        if rows_full >= tile_rows:
            blk_rows = tile_rows
        else:
            blk_rows = (rows_full // sub_mult) * sub_mult

        num_blocks = pl.cdiv(rows_full, blk_rows)
        P = num_parallel_chunks if num_blocks >= num_parallel_chunks else 1
        K = pl.cdiv(num_blocks, P)

        # Mask only when the rectangular (P, K) grid over-covers rows_full.
        needs_mask = (P * K * blk_rows) != rows_full
        first_mask_block = rows_full // blk_rows
        last_block = num_blocks - 1

        def in_map(p, k):
            g = p * K + k
            # Clamp so no DMA window starts past the array; the kernel masks
            # any rows >= rows_full regardless of what data is read.
            return (jnp.minimum(g, last_block), 0)

        def out_map(p, k):
            return (p, 0)

        acc_shape = jax.ShapeDtypeStruct((P * ACC_ROWS, LANES), jnp.float32)

        in_bytes = 2 * bulk_elems * itemsize
        cost = pl.CostEstimate(
            flops=10 * bulk_elems,
            transcendentals=2 * bulk_elems,
            bytes_accessed=in_bytes + 3 * P * ACC_ROWS * LANES * 4,
        )

        kernel = functools.partial(
            _bbce_sums_kernel,
            blk_rows=blk_rows,
            valid_rows=rows_full,
            first_mask_block=first_mask_block,
            needs_mask=needs_mask,
        )

        s_v, a_v, b_v = pl.pallas_call(
            kernel,
            out_shape=(acc_shape, acc_shape, acc_shape),
            grid_spec=pltpu.PrefetchScalarGridSpec(
                num_scalar_prefetch=0,
                grid=(P, K),
                in_specs=[
                    pl.BlockSpec((blk_rows, LANES), in_map),
                    pl.BlockSpec((blk_rows, LANES), in_map),
                ],
                out_specs=(
                    pl.BlockSpec((ACC_ROWS, LANES), out_map),
                    pl.BlockSpec((ACC_ROWS, LANES), out_map),
                    pl.BlockSpec((ACC_ROWS, LANES), out_map),
                ),
            ),
            compiler_params=pltpu.CompilerParams(
                dimension_semantics=("parallel", "arbitrary"),
                vmem_limit_bytes=32 * 1024 * 1024,
            ),
            cost_estimate=cost,
        )(p2, t2)

        S = S + jnp.sum(s_v)
        A = A + jnp.sum(a_v)
        B = B + jnp.sum(b_v)

    if bulk_elems < n:
        # Leftover elements (< 128, or tiny inputs): plain jnp, cheap.
        pt = preds_flat[bulk_elems:].astype(jnp.float32)
        tt = targets_flat[bulk_elems:].astype(jnp.float32)
        S = S + jnp.sum(tt)
        A = A + jnp.sum(tt * jnp.log(pt + EPS))
        B = B + jnp.sum((1.0 - tt) * jnp.log(1.0 - pt + EPS))

    num_negative = n_f - S
    pos_weight = num_negative / (n_f + EPS)
    neg_weight = S / (n_f + EPS)

    # mean over all elements of (-pos_w*t*log(p+eps) - neg_w*(1-t)*log(1-p+eps))
    loss = (-pos_weight * A - neg_weight * B) / n_f
    return loss


def _reference_loss(preds, targets):
    preds = preds.astype(jnp.float32)
    targets = targets.astype(jnp.float32)
    num_positive = jnp.sum(targets)
    num_negative = targets.size - num_positive
    num_total = num_positive + num_negative
    pos_weight = num_negative / (num_total + 1e-6)
    neg_weight = num_positive / (num_total + 1e-6)
    positive_loss = -pos_weight * targets * jnp.log(preds + 1e-6)
    negative_loss = -neg_weight * (1 - targets) * jnp.log(1 - preds + 1e-6)
    return (positive_loss + negative_loss).mean()


if __name__ == "__main__":
    key = jax.random.PRNGKey(0)
    k1, k2 = jax.random.split(key)

    B, C, H, W = 2, 4, 16, 16  # NCHW, matching the PyTorch convention
    preds = jax.nn.sigmoid(jax.random.normal(k1, (B, C, H, W), jnp.float32))
    targets = (jax.random.uniform(k2, (B, C, H, W)) > 0.7).astype(jnp.float32)

    loss = balanced_bce_loss(preds, targets)
    loss = jax.block_until_ready(loss)

    ref = _reference_loss(preds, targets)
    assert jnp.allclose(loss, ref, rtol=1e-5, atol=1e-6), (float(loss), float(ref))

    print("KERNEL_OK")
</pallas_src>

<mosaic_0001>
module attributes {stable_mosaic.version = 11 : i64} {
  func.func @_bbce_sums_kernel(%arg0: i32, %arg1: i32, %arg2: memref<16x128xf32, #tpu.memory_space<vmem>>, %arg3: memref<16x128xf32, #tpu.memory_space<vmem>>, %arg4: memref<8x128xf32, #tpu.memory_space<vmem>>, %arg5: memref<8x128xf32, #tpu.memory_space<vmem>>, %arg6: memref<8x128xf32, #tpu.memory_space<vmem>>) attributes {dimension_semantics = [#tpu.dimension_semantics<parallel>, #tpu.dimension_semantics<arbitrary>], iteration_bounds = array<i64: 1, 1>, scalar_prefetch = 0 : i64, scratch_operands = 0 : i64, tpu.core_type = #tpu.core_type<tc>, window_params = [{transform_indices = @transform_0, window_bounds = array<i64: 16, 128>}, {transform_indices = @transform_1, window_bounds = array<i64: 16, 128>}, {transform_indices = @transform_2, window_bounds = array<i64: 8, 128>}, {transform_indices = @transform_3, window_bounds = array<i64: 8, 128>}, {transform_indices = @transform_4, window_bounds = array<i64: 8, 128>}]} {
    %c0_i32 = arith.constant 0 : i32
    %0 = arith.cmpi eq, %arg1, %c0_i32 : i32
    %1 = arith.extui %0 : i1 to i32
    %c0_i32_0 = arith.constant 0 : i32
    %2 = arith.cmpi ne, %1, %c0_i32_0 : i32
    scf.if %2 {
      %cst_22 = arith.constant 0.000000e+00 : f32
      %32 = vector.broadcast %cst_22 : f32 to vector<8x128xf32>
      %c0_23 = arith.constant 0 : index
      %c0_24 = arith.constant 0 : index
      %33 = vector.load %arg4[%c0_23, %c0_24] : memref<8x128xf32, #tpu.memory_space<vmem>>, vector<8x128xf32>
      tpu.vector_store %arg4[%c0_23, %c0_24], %32 {strides = array<i32>} : memref<8x128xf32, #tpu.memory_space<vmem>>, vector<8x128xf32>,
      %cst_25 = arith.constant 0.000000e+00 : f32
      %34 = vector.broadcast %cst_25 : f32 to vector<8x128xf32>
      %c0_26 = arith.constant 0 : index
      %c0_27 = arith.constant 0 : index
      %35 = vector.load %arg5[%c0_26, %c0_27] : memref<8x128xf32, #tpu.memory_space<vmem>>, vector<8x128xf32>
      tpu.vector_store %arg5[%c0_26, %c0_27], %34 {strides = array<i32>} : memref<8x128xf32, #tpu.memory_space<vmem>>, vector<8x128xf32>,
      %cst_28 = arith.constant 0.000000e+00 : f32
      %36 = vector.broadcast %cst_28 : f32 to vector<8x128xf32>
      %c0_29 = arith.constant 0 : index
      %c0_30 = arith.constant 0 : index
      %37 = vector.load %arg6[%c0_29, %c0_30] : memref<8x128xf32, #tpu.memory_space<vmem>>, vector<8x128xf32>
      tpu.vector_store %arg6[%c0_29, %c0_30], %36 {strides = array<i32>} : memref<8x128xf32, #tpu.memory_space<vmem>>, vector<8x128xf32>,
    } else {
    }
    %c0 = arith.constant 0 : index
    %c0_1 = arith.constant 0 : index
    %3 = vector.load %arg2[%c0, %c0_1] : memref<16x128xf32, #tpu.memory_space<vmem>>, vector<16x128xf32>
    %c0_2 = arith.constant 0 : index
    %c0_3 = arith.constant 0 : index
    %4 = vector.load %arg3[%c0_2, %c0_3] : memref<16x128xf32, #tpu.memory_space<vmem>>, vector<16x128xf32>
    %cst = arith.constant 9.99999997E-7 : f32
    %5 = vector.broadcast %cst : f32 to vector<16x128xf32>
    %6 = arith.addf %3, %5 : vector<16x128xf32>
    %7 = math.log %6 : vector<16x128xf32>
    %cst_4 = arith.constant 1.000000e+00 : f32
    %8 = vector.broadcast %cst_4 : f32 to vector<16x128xf32>
    %9 = arith.subf %8, %3 : vector<16x128xf32>
    %cst_5 = arith.constant 9.99999997E-7 : f32
    %10 = vector.broadcast %cst_5 : f32 to vector<16x128xf32>
    %11 = arith.addf %9, %10 : vector<16x128xf32>
    %12 = math.log %11 : vector<16x128xf32>
    %13 = arith.mulf %4, %7 : vector<16x128xf32>
    %cst_6 = arith.constant 1.000000e+00 : f32
    %14 = vector.broadcast %cst_6 : f32 to vector<16x128xf32>
    %15 = arith.subf %14, %4 : vector<16x128xf32>
    %16 = arith.mulf %15, %12 : vector<16x128xf32>
    %c0_7 = arith.constant 0 : index
    %c0_8 = arith.constant 0 : index
    %17 = vector.load %arg4[%c0_7, %c0_8] : memref<8x128xf32, #tpu.memory_space<vmem>>, vector<8x128xf32>
    %18 = vector.shape_cast %4 : vector<16x128xf32> to vector<2x8x128xf32>
    %cst_9 = arith.constant dense<0.000000e+00> : vector<8x128xf32>
    %19 = vector.multi_reduction <add>, %18, %cst_9 [0] : vector<2x8x128xf32> to vector<8x128xf32>
    %20 = arith.addf %17, %19 : vector<8x128xf32>
    %c0_10 = arith.constant 0 : index
    %c0_11 = arith.constant 0 : index
    %21 = vector.load %arg4[%c0_10, %c0_11] : memref<8x128xf32, #tpu.memory_space<vmem>>, vector<8x128xf32>
    tpu.vector_store %arg4[%c0_10, %c0_11], %20 {strides = array<i32>} : memref<8x128xf32, #tpu.memory_space<vmem>>, vector<8x128xf32>,
    %c0_12 = arith.constant 0 : index
    %c0_13 = arith.constant 0 : index
    %22 = vector.load %arg5[%c0_12, %c0_13] : memref<8x128xf32, #tpu.memory_space<vmem>>, vector<8x128xf32>
    %23 = vector.shape_cast %13 : vector<16x128xf32> to vector<2x8x128xf32>
    %cst_14 = arith.constant dense<0.000000e+00> : vector<8x128xf32>
    %24 = vector.multi_reduction <add>, %23, %cst_14 [0] : vector<2x8x128xf32> to vector<8x128xf32>
    %25 = arith.addf %22, %24 : vector<8x128xf32>
    %c0_15 = arith.constant 0 : index
    %c0_16 = arith.constant 0 : index
    %26 = vector.load %arg5[%c0_15, %c0_16] : memref<8x128xf32, #tpu.memory_space<vmem>>, vector<8x128xf32>
    tpu.vector_store %arg5[%c0_15, %c0_16], %25 {strides = array<i32>} : memref<8x128xf32, #tpu.memory_space<vmem>>, vector<8x128xf32>,
    %c0_17 = arith.constant 0 : index
    %c0_18 = arith.constant 0 : index
    %27 = vector.load %arg6[%c0_17, %c0_18] : memref<8x128xf32, #tpu.memory_space<vmem>>, vector<8x128xf32>
    %28 = vector.shape_cast %16 : vector<16x128xf32> to vector<2x8x128xf32>
    %cst_19 = arith.constant dense<0.000000e+00> : vector<8x128xf32>
    %29 = vector.multi_reduction <add>, %28, %cst_19 [0] : vector<2x8x128xf32> to vector<8x128xf32>
    %30 = arith.addf %27, %29 : vector<8x128xf32>
    %c0_20 = arith.constant 0 : index
    %c0_21 = arith.constant 0 : index
    %31 = vector.load %arg6[%c0_20, %c0_21] : memref<8x128xf32, #tpu.memory_space<vmem>>, vector<8x128xf32>
    tpu.vector_store %arg6[%c0_20, %c0_21], %30 {strides = array<i32>} : memref<8x128xf32, #tpu.memory_space<vmem>>, vector<8x128xf32>,
    return
  }
  func.func @transform_0(%arg0: i32, %arg1: i32) -> (i32, i32) {
    %c1_i32 = arith.constant 1 : i32
    %0 = arith.muli %arg0, %c1_i32 : i32
    %1 = arith.addi %0, %arg1 : i32
    %c0_i32 = arith.constant 0 : i32
    %2 = arith.minsi %1, %c0_i32 : i32
    %c0_i32_0 = arith.constant 0 : i32
    %c0_i32_1 = arith.constant 0 : i32
    return %2, %c0_i32_0 : i32, i32
  }
  func.func @transform_1(%arg0: i32, %arg1: i32) -> (i32, i32) {
    %c1_i32 = arith.constant 1 : i32
    %0 = arith.muli %arg0, %c1_i32 : i32
    %1 = arith.addi %0, %arg1 : i32
    %c0_i32 = arith.constant 0 : i32
    %2 = arith.minsi %1, %c0_i32 : i32
    %c0_i32_0 = arith.constant 0 : i32
    %c0_i32_1 = arith.constant 0 : i32
    return %2, %c0_i32_0 : i32, i32
  }
  func.func @transform_2(%arg0: i32, %arg1: i32) -> (i32, i32) {
    %c0_i32 = arith.constant 0 : i32
    %c0_i32_0 = arith.constant 0 : i32
    return %arg0, %c0_i32 : i32, i32
  }
  func.func @transform_3(%arg0: i32, %arg1: i32) -> (i32, i32) {
    %c0_i32 = arith.constant 0 : i32
    %c0_i32_0 = arith.constant 0 : i32
    return %arg0, %c0_i32 : i32, i32
  }
  func.func @transform_4(%arg0: i32, %arg1: i32) -> (i32, i32) {
    %c0_i32 = arith.constant 0 : i32
    %c0_i32_0 = arith.constant 0 : i32
    return %arg0, %c0_i32 : i32, i32
  }
}

</mosaic_0001>

<llo_original>
// kernel: tpu_custom_call.1
$region0: #{tpu_custom_call.1}
  #allocation0 [shape = 'u32[]', space=smem, size = 0x4, offset = 0x4, fixed_abs, tag = 'smem constant byte address 0x4 - core index']
  #allocation1 [shape = 'u32[144,128]{1,0:T(1,128)}', space=vmem, size = 0x12000, scoped, tag = 'internal scratch']
  %s0 = inlined_call_operand.hbm [shape: f32[16,128], index: 0, kind: input, shape index: {}]
  %s1 = inlined_call_operand.hbm [shape: f32[16,128], index: 1, kind: input, shape index: {}]
  %s2 = inlined_call_operand.hbm [shape: f32[8,128], index: 2, kind: output, shape index: {0}]
  %s3 = inlined_call_operand.hbm [shape: f32[8,128], index: 3, kind: output, shape index: {1}]
  %s4 = inlined_call_operand.hbm [shape: f32[8,128], index: 4, kind: output, shape index: {2}]
  %5 = xla_tuple %s2, %s3, %s4
  %s6 = sld [smem:[#allocation0]]
  $region46: #{tpu_custom_call.1} parent=0
    _
  %s8 = ssub.s32 1, %s6
  %s9 = scalar_select 0, %s8, %s6
  $region1: #{tpu_custom_call.1} parent=0
    #allocation2 [shape = 'u8[8192]{0}', space=vmem, size = 0x2000, scoped, tag = 'input window, operand 0, single buffered']
    #allocation3 [shape = 's32[1]{0}', space=sflag, size = 0x4, scoped, tag = 'scoped memory for tpu_custom_call.1']
    #allocation4 [shape = 's32[1]{0}', space=sflag, size = 0x4, scoped, tag = 'scoped memory for tpu_custom_call.1']
    #allocation5 [shape = 'u8[8192]{0}', space=vmem, size = 0x2000, scoped, tag = 'input window, operand 1, single buffered']
    #allocation6 [shape = 's32[1]{0}', space=sflag, size = 0x4, scoped, tag = 'scoped memory for tpu_custom_call.1']
    #allocation7 [shape = 'u8[4096]{0}', space=vmem, size = 0x1000, scoped, tag = 'output window, operand 0, single buffered']
    #allocation8 [shape = 'u8[4096]{0}', space=vmem, size = 0x1000, scoped, tag = 'output window, operand 1, single buffered']
    #allocation9 [shape = 's32[1]{0}', space=sflag, size = 0x4, scoped, tag = 'scoped memory for tpu_custom_call.1']
    #allocation10 [shape = 'u8[4096]{0}', space=vmem, size = 0x1000, scoped, tag = 'output window, operand 2, single buffered']
    %10 = vsyncpa [#allocation3], 0
    %11 = vsyncpa [#allocation6], 0
    %12 = vsyncpa [#allocation4], 0
    %13 = vsyncpa [#allocation9], 0
    // Predicated region
    $region2: #{tpu_custom_call.1} parent=1 // pred_check
      _
    $region3: #{tpu_custom_call.1} parent=1 // pred_check_branch
      %15 = sbr.rel (0) target = $region5
    $region4: #{tpu_custom_call.1} parent=1 // pred_region
      %s16 = sadd.s32 0, 0
      %p17 = scmp.lt.s32.totalorder %s16, 0
      %s18 = scalar_select %p17, %s16, 0
      %s19 = smul.u32 2, %s18
      %s21 = ssub.s32 256, 256
      %22 = vsyncadd [#allocation3], %s21
      %s23 = smul.addr %s19, 128
      %s24 = scalar_lea.hbm %s0, %s23
      %s25 = sshll.u32 [#allocation2], 4
      %s26 = int_to_ptr.vmem [resolvable:$true] %s25
      %31 = dma.hbm_to_vmem [thread:$0]  %s24, 256, %s26, [#allocation3], 128, 128, 8
    $region5: #{tpu_custom_call.1} parent=1 // pred_fallthru
      _
    // Predicated region
    $region6: #{tpu_custom_call.1} parent=1 // pred_check
      _
    $region7: #{tpu_custom_call.1} parent=1 // pred_check_branch
      %33 = sbr.rel (0) target = $region9
    $region8: #{tpu_custom_call.1} parent=1 // pred_region
      %s34 = sadd.s32 0, 0
      %p35 = scmp.lt.s32.totalorder %s34, 0
      %s36 = scalar_select %p35, %s34, 0
      %s37 = smul.u32 2, %s36
      %s39 = ssub.s32 256, 256
      %40 = vsyncadd [#allocation6], %s39
      %s41 = smul.addr %s37, 128
      %s42 = scalar_lea.hbm %s1, %s41
      %s43 = sshll.u32 [#allocation5], 4
      %s44 = int_to_ptr.vmem [resolvable:$true] %s43
      %49 = dma.hbm_to_vmem [thread:$0]  %s42, 256, %s44, [#allocation6], 128, 128, 8
    $region9: #{tpu_custom_call.1} parent=1 // pred_fallthru
      _
    // Predicated region
    $region10: #{tpu_custom_call.1} parent=1 // pred_check
      _
    $region11: #{tpu_custom_call.1} parent=1 // pred_check_branch
      %51 = sbr.rel (0) target = $region13
    $region12: #{tpu_custom_call.1} parent=1 // pred_region
      %52 = dma.done [#allocation3], 256
    $region13: #{tpu_custom_call.1} parent=1 // pred_fallthru
      _
    // Predicated region
    $region14: #{tpu_custom_call.1} parent=1 // pred_check
      _
    $region15: #{tpu_custom_call.1} parent=1 // pred_check_branch
      %54 = sbr.rel (0) target = $region17
    $region16: #{tpu_custom_call.1} parent=1 // pred_region
      %55 = dma.done [#allocation6], 256
    $region17: #{tpu_custom_call.1} parent=1 // pred_fallthru
      _
    %s56 = sadd.s32 0, 0
    %p57 = scmp.lt.s32.totalorder %s56, 0
    %s58 = scalar_select %p57, %s56, 0
    %s59 = smul.u32 2, %s58
    %s60 = sadd.s32 0, 0
    %p61 = scmp.lt.s32.totalorder %s60, 0
    %s62 = scalar_select %p61, %s60, 0
    %s63 = smul.u32 2, %s62
    %p64 = scmp.eq.s32.totalorder 0, 0
    // Predicated region
    $region18: #{tpu_custom_call.1} parent=1 // pred_check
      %p65 = pneg %p64
    $region19: #{tpu_custom_call.1} parent=1 // pred_check_branch
      %67 = sbr.rel (%p65) target = $region21
    $region20: #{tpu_custom_call.1} parent=1 // pred_region
      %68 = vst [vmem:[#allocation7] sm:$0xff] 0.0
      %69 = vst [vmem:[#allocation8] sm:$0xff] 0.0
      %70 = vst [vmem:[#allocation10] sm:$0xff] 0.0
    $region21: #{tpu_custom_call.1} parent=1 // pred_fallthru
      _
    %v71 = vld [vmem:[#allocation2] sm:$0xff]
    %v72 = vld [vmem:[#allocation2 + $0x8] sm:$0xff]
    %v73 = vld [vmem:[#allocation5] sm:$0xff]
    %v74 = vld [vmem:[#allocation5 + $0x8] sm:$0xff]
    %v75 = vadd.f32 %v71, 1e-06
    %v76 = vadd.f32 %v72, 1e-06
    %v77 = vlog2.pop %v75
    %v78 = vmul.f32 %v77, 0.6931472
    %v79 = vlog2.pop %v76
    %v80 = vmul.f32 %v79, 0.6931472
    %v81 = vsub.f32 1.0, %v71
    %v82 = vsub.f32 1.0, %v72
    %v83 = vadd.f32 %v81, 1e-06
    %v84 = vadd.f32 %v82, 1e-06
    %v85 = vlog2.pop %v83
    %v86 = vmul.f32 %v85, 0.6931472
    %v87 = vlog2.pop %v84
    %v88 = vmul.f32 %v87, 0.6931472
    %v89 = vmul.f32 %v73, %v78
    %v90 = vmul.f32 %v74, %v80
    %v91 = vsub.f32 1.0, %v73
    %v92 = vsub.f32 1.0, %v74
    %v93 = vmul.f32 %v91, %v86
    %v94 = vmul.f32 %v92, %v88
    %v95 = vld [vmem:[#allocation7] sm:$0xff]
    %v96 = vadd.f32 %v73, %v74
    %v97 = vadd.f32 %v95, %v96
    %98 = vst [vmem:[#allocation7] sm:$0xff] %v97
    %v99 = vld [vmem:[#allocation8] sm:$0xff]
    %v100 = vadd.f32 %v89, %v90
    %v101 = vadd.f32 %v99, %v100
    %102 = vst [vmem:[#allocation8] sm:$0xff] %v101
    %v103 = vld [vmem:[#allocation10] sm:$0xff]
    %v104 = vadd.f32 %v93, %v94
    %v105 = vadd.f32 %v103, %v104
    %106 = vst [vmem:[#allocation10] sm:$0xff] %v105
    // Predicated region
    $region22: #{tpu_custom_call.1} parent=1 // pred_check
      _
    $region23: #{tpu_custom_call.1} parent=1 // pred_check_branch
      %108 = sbr.rel (0) target = $region25
    $region24: #{tpu_custom_call.1} parent=1 // pred_region
      %s110 = ssub.s32 128, 128
      %111 = vsyncadd [#allocation4], %s110
      %s113 = sshll.u32 [#allocation7], 4
      %s114 = int_to_ptr.vmem [resolvable:$true] %s113
      %116 = dma.vmem_to_hbm [thread:$0]  %s114, 128, %s2, [#allocation4]
    $region25: #{tpu_custom_call.1} parent=1 // pred_fallthru
      _
    // Predicated region
    $region26: #{tpu_custom_call.1} parent=1 // pred_check
      _
    $region27: #{tpu_custom_call.1} parent=1 // pred_check_branch
      %118 = sbr.rel (0) target = $region29
    $region28: #{tpu_custom_call.1} parent=1 // pred_region
      %s120 = ssub.s32 128, 128
      %121 = vsyncadd [#allocation9], %s120
      %s123 = sshll.u32 [#allocation8], 4
      %s124 = int_to_ptr.vmem [resolvable:$true] %s123
      %126 = dma.vmem_to_hbm [thread:$0]  %s124, 128, %s3, [#allocation9]
    $region29: #{tpu_custom_call.1} parent=1 // pred_fallthru
      _
    // Predicated region
    $region30: #{tpu_custom_call.1} parent=1 // pred_check
      _
    $region31: #{tpu_custom_call.1} parent=1 // pred_check_branch
      %128 = sbr.rel (0) target = $region33
    $region32: #{tpu_custom_call.1} parent=1 // pred_region
      %s130 = ssub.s32 128, 128
      %131 = vsyncadd [#allocation9], %s130
      %s133 = sshll.u32 [#allocation10], 4
      %s134 = int_to_ptr.vmem [resolvable:$true] %s133
      %136 = dma.vmem_to_hbm [thread:$0]  %s134, 128, %s4, [#allocation9]
    $region33: #{tpu_custom_call.1} parent=1 // pred_fallthru
      _
    // Predicated region
    $region34: #{tpu_custom_call.1} parent=1 // pred_check
      _
    $region35: #{tpu_custom_call.1} parent=1 // pred_check_branch
      %138 = sbr.rel (0) target = $region37
    $region36: #{tpu_custom_call.1} parent=1 // pred_region
      %139 = dma.done [#allocation4], 128
    $region37: #{tpu_custom_call.1} parent=1 // pred_fallthru
      _
    // Predicated region
    $region38: #{tpu_custom_call.1} parent=1 // pred_check
      _
    $region39: #{tpu_custom_call.1} parent=1 // pred_check_branch
      %141 = sbr.rel (0) target = $region41
    $region40: #{tpu_custom_call.1} parent=1 // pred_region
      %142 = dma.done [#allocation9], 128
    $region41: #{tpu_custom_call.1} parent=1 // pred_fallthru
      _
    // Predicated region
    $region42: #{tpu_custom_call.1} parent=1 // pred_check
      _
    $region43: #{tpu_custom_call.1} parent=1 // pred_check_branch
      %144 = sbr.rel (0) target = $region45
    $region44: #{tpu_custom_call.1} parent=1 // pred_region
      %145 = dma.done [#allocation9], 128
    $region45: #{tpu_custom_call.1} parent=1 // pred_fallthru
      _
    %146 = vsyncpa [#allocation3], 1
    %147 = vsyncpa [#allocation6], 1
    %148 = vsyncpa [#allocation4], 1
    %149 = vsyncpa [#allocation9], 1

</llo_original>
